<compile_context>
chip_gen: v6e
topology: v6e:2x2x1
jax: 0.10.0
libtpu: 0.0.40
codegen_flags: <defaults>
</compile_context>

<pallas_src>
import math

import jax
import jax.numpy as jnp
from jax.experimental import pallas as pl
from jax.experimental.pallas import tpu as pltpu


_LANES = 1024       # wide lane-dense slab (multiple of 128)
_TILE_ROWS = 512    # 512 x 1024 x 4B = 2 MiB/block; in+out double-buffered ~8 MiB


def _round_half_even(v: float) -> int:
    # Python's round() is banker's rounding, same as torch.round on a scalar.
    return int(round(v))


class ActivationFakeQuantizeParams:
    """Mirrors TorchActivationFakeQuantize.__init__ (deterministic, no checkpoint)."""

    def __init__(self, min_range: float, max_range: float, n_bits: int):
        self.scale = float((max_range - min_range) / (2 ** n_bits - 1))
        zp = _round_half_even(min_range / self.scale)
        self.zero_point = -zp if min_range < 0 else zp
        self.n_bits = n_bits
        self.quant_min = 0
        self.quant_max = 2 ** n_bits - 1


def _make_fake_quant_kernel(scale: float, zero_point: int, qmin: int, qmax: int):
    # Fold zero_point into the clamp bounds (exact, since round() is integer-valued):
    #   clamp(round(x/s) + zp, qmin, qmax) - zp == clamp(round(x/s), qmin - zp, qmax - zp)
    lo = float(qmin - zero_point)
    hi = float(qmax - zero_point)
    scale_f = float(scale)

    def kernel(x_ref, o_ref):
        # Single explicit up-cast: bf16 inputs keep 2 B/elem HBM traffic but
        # compute in f32 (v5e has no bf16 VPU datapath).
        x = x_ref[...].astype(jnp.float32)
        # True division so half-to-even rounding matches round(x / scale).
        q = jnp.round(x / scale_f)
        q = jnp.clip(q, lo, hi)
        o_ref[...] = (q * scale_f).astype(o_ref.dtype)

    return kernel


def activation_fake_quantize(x: jax.Array, params: ActivationFakeQuantizeParams) -> jax.Array:
    """Elementwise fake-quantize of an arbitrarily-shaped float tensor."""
    orig_shape = x.shape
    orig_dtype = x.dtype
    total = math.prod(orig_shape)

    # Lane-dense 2D slab. Pad only when total is not a multiple of the lane
    # width (NCHW conv activations are almost always 1024-aligned), so the
    # common case incurs zero extra pad/slice HBM traffic.
    padded = pl.cdiv(total, _LANES) * _LANES
    x_flat = jnp.reshape(x, (total,))
    if padded != total:
        x_flat = jnp.pad(x_flat, (0, padded - total))
    rows = padded // _LANES
    x2d = jnp.reshape(x_flat, (rows, _LANES))

    # Row tile: full array when small (legal: equals array dim), else 512 rows.
    # Partial last grid block is handled by Pallas with masked writes.
    tile_r = rows if rows <= _TILE_ROWS else _TILE_ROWS
    grid = (pl.cdiv(rows, tile_r),)

    kernel = _make_fake_quant_kernel(
        params.scale, params.zero_point, params.quant_min, params.quant_max
    )

    y2d = pl.pallas_call(
        kernel,
        out_shape=jax.ShapeDtypeStruct((rows, _LANES), orig_dtype),
        grid=grid,
        in_specs=[pl.BlockSpec((tile_r, _LANES), lambda i: (i, 0))],
        out_specs=pl.BlockSpec((tile_r, _LANES), lambda i: (i, 0)),
        compiler_params=pltpu.CompilerParams(
            dimension_semantics=("parallel",),
        ),
    )(x2d)

    y = jnp.reshape(y2d, (padded,))
    if padded != total:
        y = y[:total]
    return jnp.reshape(y, orig_shape)


def _reference(x, params):
    # Unfolded formula, faithful to the PyTorch module's math.
    q = jnp.round(x.astype(jnp.float32) / params.scale) + params.zero_point
    q = jnp.clip(q, params.quant_min, params.quant_max)
    return ((q - params.zero_point) * params.scale).astype(x.dtype)


if __name__ == "__main__":
    # Deterministic quantizer config (what the module's __init__ consumes).
    params = ActivationFakeQuantizeParams(min_range=-1.0, max_range=1.0, n_bits=8)

    key = jax.random.PRNGKey(0)
    # NCHW activation, small shape: batch=2, channels=4, spatial=16x16.
    x = jax.random.normal(key, (2, 4, 16, 16), dtype=jnp.float32)

    y = activation_fake_quantize(x, params)
    y = jax.block_until_ready(y)
    y_ref = _reference(x, params)
    assert y.shape == x.shape and y.dtype == x.dtype
    assert bool(jnp.allclose(y, y_ref, atol=1e-6)), "mismatch vs reference (aligned)"

    # Also exercise the unaligned (pad) path once with a tiny odd shape.
    x2 = jax.random.normal(jax.random.PRNGKey(0), (2, 3, 5, 7), dtype=jnp.float32)
    y2 = jax.block_until_ready(activation_fake_quantize(x2, params))
    assert bool(jnp.allclose(y2, _reference(x2, params), atol=1e-6)), "mismatch vs reference (padded)"

    print("KERNEL_OK")
</pallas_src>

<mosaic_0001>
module attributes {stable_mosaic.version = 11 : i64} {
  func.func @kernel(%arg0: i32, %arg1: memref<2x1024xf32, #tpu.memory_space<vmem>>, %arg2: memref<2x1024xf32, #tpu.memory_space<vmem>>) attributes {dimension_semantics = [#tpu.dimension_semantics<parallel>], iteration_bounds = array<i64: 1>, scalar_prefetch = 0 : i64, scratch_operands = 0 : i64, tpu.core_type = #tpu.core_type<tc>, window_params = [{transform_indices = @transform_0, window_bounds = array<i64: 2, 1024>}, {transform_indices = @transform_1, window_bounds = array<i64: 2, 1024>}]} {
    %c0 = arith.constant 0 : index
    %c0_0 = arith.constant 0 : index
    %0 = vector.load %arg1[%c0, %c0_0] : memref<2x1024xf32, #tpu.memory_space<vmem>>, vector<2x1024xf32>
    %cst = arith.constant 0.00784313772 : f32
    %1 = vector.broadcast %cst : f32 to vector<2x1024xf32>
    %2 = arith.divf %0, %1 : vector<2x1024xf32>
    %3 = math.roundeven %2 : vector<2x1024xf32>
    %cst_1 = arith.constant -1.280000e+02 : f32
    %cst_2 = arith.constant 1.270000e+02 : f32
    %4 = vector.broadcast %cst_1 : f32 to vector<2x1024xf32>
    %5 = arith.maximumf %4, %3 : vector<2x1024xf32>
    %6 = vector.broadcast %cst_2 : f32 to vector<2x1024xf32>
    %7 = arith.minimumf %6, %5 : vector<2x1024xf32>
    %cst_3 = arith.constant 0.00784313772 : f32
    %8 = vector.broadcast %cst_3 : f32 to vector<2x1024xf32>
    %9 = arith.mulf %7, %8 : vector<2x1024xf32>
    %c0_4 = arith.constant 0 : index
    %c0_5 = arith.constant 0 : index
    %10 = vector.load %arg2[%c0_4, %c0_5] : memref<2x1024xf32, #tpu.memory_space<vmem>>, vector<2x1024xf32>
    tpu.vector_store %arg2[%c0_4, %c0_5], %9 {strides = array<i32>} : memref<2x1024xf32, #tpu.memory_space<vmem>>, vector<2x1024xf32>,
    return
  }
  func.func @transform_0(%arg0: i32) -> (i32, i32) {
    %c0_i32 = arith.constant 0 : i32
    %c0_i32_0 = arith.constant 0 : i32
    return %arg0, %c0_i32 : i32, i32
  }
  func.func @transform_1(%arg0: i32) -> (i32, i32) {
    %c0_i32 = arith.constant 0 : i32
    %c0_i32_0 = arith.constant 0 : i32
    return %arg0, %c0_i32 : i32, i32
  }
}

</mosaic_0001>

<llo_original>
// kernel: tpu_custom_call.1
$region0: #{tpu_custom_call.1}
  #allocation0 [shape = 'u32[]', space=smem, size = 0x4, offset = 0x4, fixed_abs, tag = 'smem constant byte address 0x4 - core index']
  #allocation1 [shape = 'u32[144,128]{1,0:T(1,128)}', space=vmem, size = 0x12000, scoped, tag = 'internal scratch']
  %s0 = inlined_call_operand.hbm [shape: f32[2,1024], index: 0, kind: input, shape index: {}]
  %s1 = inlined_call_operand.hbm [shape: f32[2,1024], index: 1, kind: output, shape index: {}]
  %s2 = sld [smem:[#allocation0]]
  $region18: #{tpu_custom_call.1} parent=0
    _
  %s4 = ssub.s32 1, %s2
  %s5 = scalar_select 0, %s4, %s2
  $region1: #{tpu_custom_call.1} parent=0
    #allocation2 [shape = 'u8[8192]{0}', space=vmem, size = 0x2000, scoped, tag = 'input window, operand 0, single buffered']
    #allocation3 [shape = 's32[1]{0}', space=sflag, size = 0x4, scoped, tag = 'scoped memory for tpu_custom_call.1']
    #allocation4 [shape = 's32[1]{0}', space=sflag, size = 0x4, scoped, tag = 'scoped memory for tpu_custom_call.1']
    #allocation5 [shape = 'u8[8192]{0}', space=vmem, size = 0x2000, scoped, tag = 'output window, operand 0, single buffered']
    %6 = vsyncpa [#allocation3], 0
    %7 = vsyncpa [#allocation4], 0
    // Predicated region
    $region2: #{tpu_custom_call.1} parent=1 // pred_check
      _
    $region3: #{tpu_custom_call.1} parent=1 // pred_check_branch
      %9 = sbr.rel (0) target = $region5
    $region4: #{tpu_custom_call.1} parent=1 // pred_region
      %s11 = ssub.s32 256, 256
      %12 = vsyncadd [#allocation3], %s11
      %s14 = sshll.u32 [#allocation2], 4
      %s15 = int_to_ptr.vmem [resolvable:$true] %s14
      %17 = dma.hbm_to_vmem [thread:$0]  %s0, 256, %s15, [#allocation3]
    $region5: #{tpu_custom_call.1} parent=1 // pred_fallthru
      _
    // Predicated region
    $region6: #{tpu_custom_call.1} parent=1 // pred_check
      _
    $region7: #{tpu_custom_call.1} parent=1 // pred_check_branch
      %19 = sbr.rel (0) target = $region9
    $region8: #{tpu_custom_call.1} parent=1 // pred_region
      %20 = dma.done [#allocation3], 256
    $region9: #{tpu_custom_call.1} parent=1 // pred_fallthru
      _
    %v21 = vld [vmem:[#allocation2] sm:$0xff]
    %v22 = vld [vmem:[#allocation2 + $0x8] sm:$0xff]
    %v23 = vrcp.pop 0.007843138
    %v24 = vmul.f32 %v21, %v23
    %v25 = vmul.f32 %v22, %v23
    %v26 = vround.ne.pseudo %v24
    %v27 = vround.ne.pseudo %v25
    %v28 = vmax.f32 %v26, -128.0
    %v29 = vmax.f32 %v27, -128.0
    %v30 = vmin.f32 %v28, 127.0
    %v31 = vmin.f32 %v29, 127.0
    %v32 = vmul.f32 %v30, 0.007843138
    %v33 = vmul.f32 %v31, 0.007843138
    %34 = vst [vmem:[#allocation5] sm:$0xff] %v32
    %35 = vst [vmem:[#allocation5 + $0x8] sm:$0xff] %v33
    // Predicated region
    $region10: #{tpu_custom_call.1} parent=1 // pred_check
      _
    $region11: #{tpu_custom_call.1} parent=1 // pred_check_branch
      %37 = sbr.rel (0) target = $region13
    $region12: #{tpu_custom_call.1} parent=1 // pred_region
      %s39 = ssub.s32 256, 256
      %40 = vsyncadd [#allocation4], %s39
      %s42 = sshll.u32 [#allocation5], 4
      %s43 = int_to_ptr.vmem [resolvable:$true] %s42
      %45 = dma.vmem_to_hbm [thread:$0]  %s43, 256, %s1, [#allocation4]
    $region13: #{tpu_custom_call.1} parent=1 // pred_fallthru
      _
    // Predicated region
    $region14: #{tpu_custom_call.1} parent=1 // pred_check
      _
    $region15: #{tpu_custom_call.1} parent=1 // pred_check_branch
      %47 = sbr.rel (0) target = $region17
    $region16: #{tpu_custom_call.1} parent=1 // pred_region
      %48 = dma.done [#allocation4], 256
    $region17: #{tpu_custom_call.1} parent=1 // pred_fallthru
      _
    %49 = vsyncpa [#allocation3], 1
    %50 = vsyncpa [#allocation4], 1

</llo_original>
